<compile_context>
chip_gen: v6e
topology: v6e:2x2x1
jax: 0.10.0
libtpu: 0.0.40
codegen_flags: <defaults>
</compile_context>

<pallas_src>
import jax
import jax.numpy as jnp
from jax.experimental import pallas as pl
from jax.experimental.pallas import tpu as pltpu

N = 32             # nodes (small synthetic graph instead of Cora's 2708)
F_IN = 64          # node features (instead of 1433)
HIDDEN = 16        # conv1 output width (matches the spec)
NUM_CLASSES = 7    # Cora classes
C_PAD = 128        # lane-padded classifier width for a lane-dense output store
BN_EPS = 1e-5
NEG_BIG = jnp.float32(-1e30)


def gcn_fused_kernel(x_ref, adj_ref, w1_ref, b1_ref, scale_ref, shift_ref,
                     w2_ref, b2_ref, out_ref):
    a = adj_ref[...]                                              # (N, N) A + I

    # Symmetric GCN normalization: hat(A) = D^-1/2 (A+I) D^-1/2.
    # For an undirected graph row sums == column sums, so both degree vectors
    # come from cheap reductions and no in-kernel transpose is needed.
    dinv_col = jax.lax.rsqrt(jnp.sum(a, axis=1, keepdims=True))   # (N, 1)
    dinv_row = jax.lax.rsqrt(jnp.sum(a, axis=0, keepdims=True))   # (1, N)
    a_hat = a * dinv_col * dinv_row                               # (N, N)

    # ---- layer 1: GCNConv(F_IN -> HIDDEN) + ReLU + folded BatchNorm (eval) ----
    xw = jnp.dot(x_ref[...], w1_ref[...], preferred_element_type=jnp.float32)
    h = jnp.dot(a_hat, xw, preferred_element_type=jnp.float32) + b1_ref[...]
    h = jnp.maximum(h, 0.0)                                       # ReLU
    h = h * scale_ref[...] + shift_ref[...]                       # BN folded
    # dropout(p=0.5): identity in eval mode (see TODO above).

    # ---- layer 2: GCNConv(HIDDEN -> C_PAD) + log_softmax -----------------------
    # Padded weight columns are zero and padded biases are -1e30, so padded
    # lanes never influence the softmax and are sliced off in the wrapper.
    hw = jnp.dot(h, w2_ref[...], preferred_element_type=jnp.float32)
    logits = jnp.dot(a_hat, hw, preferred_element_type=jnp.float32) + b2_ref[...]
    m = jnp.max(logits, axis=1, keepdims=True)
    z = logits - m
    lse = jnp.log(jnp.sum(jnp.exp(z), axis=1, keepdims=True))
    out_ref[...] = z - lse                                        # log_softmax


def _vmem_specs(n):
    return [pl.BlockSpec(memory_space=pltpu.MemorySpace.VMEM) for _ in range(n)]


def gcn_forward(x, adj, params):
    logp_pad = pl.pallas_call(
        gcn_fused_kernel,
        out_shape=jax.ShapeDtypeStruct((N, C_PAD), jnp.float32),
        in_specs=_vmem_specs(8),
        out_specs=pl.BlockSpec(memory_space=pltpu.MemorySpace.VMEM),
    )(x, adj, params["w1"], params["b1"], params["bn_scale"],
      params["bn_shift"], params["w2_pad"], params["b2_pad"])
    return logp_pad[:, :NUM_CLASSES]


def gcn_reference(x, adj, p):
    """Pure-JAX reference with unfolded BN and unpadded classifier."""
    dinv = jax.lax.rsqrt(jnp.sum(adj, axis=1))
    a_hat = adj * dinv[:, None] * dinv[None, :]
    h = a_hat @ (x @ p["w1"]) + p["b1"]
    h = jnp.maximum(h, 0.0)
    h = (h - p["mean"]) * p["gamma"] / jnp.sqrt(p["var"] + BN_EPS) + p["beta"]
    logits = a_hat @ (h @ p["w2"]) + p["b2"]
    return jax.nn.log_softmax(logits, axis=1)


def init_params(key):
    ks = jax.random.split(key, 8)
    w1 = jax.random.normal(ks[0], (F_IN, HIDDEN), jnp.float32) * 0.1
    b1 = jax.random.normal(ks[1], (1, HIDDEN), jnp.float32) * 0.05
    w2 = jax.random.normal(ks[2], (HIDDEN, NUM_CLASSES), jnp.float32) * 0.1
    b2 = jax.random.normal(ks[3], (1, NUM_CLASSES), jnp.float32) * 0.05

    gamma = jax.random.uniform(ks[4], (1, HIDDEN), jnp.float32, 0.8, 1.2)
    beta = jax.random.normal(ks[5], (1, HIDDEN), jnp.float32) * 0.05
    mean = jax.random.normal(ks[6], (1, HIDDEN), jnp.float32) * 0.1   # running_mean
    var = jax.random.uniform(ks[7], (1, HIDDEN), jnp.float32, 0.5, 1.5)  # running_var

    # Fold eval-mode BatchNorm1d into scale/shift.
    bn_scale = gamma * jax.lax.rsqrt(var + BN_EPS)
    bn_shift = beta - mean * bn_scale

    # Lane-pad the classifier: zero weight columns + -1e30 bias on padded lanes
    # so the kernel's output store is lane-dense and the softmax is unaffected.
    w2_pad = jnp.zeros((HIDDEN, C_PAD), jnp.float32).at[:, :NUM_CLASSES].set(w2)
    b2_pad = jnp.full((1, C_PAD), NEG_BIG, jnp.float32).at[:, :NUM_CLASSES].set(b2)

    return dict(w1=w1, b1=b1, bn_scale=bn_scale, bn_shift=bn_shift,
                w2_pad=w2_pad, b2_pad=b2_pad,
                # unfolded copies for the pure-JAX reference
                w2=w2, b2=b2, gamma=gamma, beta=beta, mean=mean, var=var)


if __name__ == "__main__":
    key = jax.random.PRNGKey(0)
    kx, ka, kp = jax.random.split(key, 3)

    x = jax.random.normal(kx, (N, F_IN), jnp.float32)

    # Random undirected graph with self loops, as a dense 0/1 float adjacency.
    adj = jax.random.bernoulli(ka, 0.15, (N, N)).astype(jnp.float32)
    adj = jnp.maximum(adj, adj.T)
    adj = jnp.maximum(adj, jnp.eye(N, dtype=jnp.float32))

    params = init_params(kp)

    logp = jax.block_until_ready(gcn_forward(x, adj, params))
    ref = gcn_reference(x, adj, params)

    # Sanity: shape, finiteness, rows of exp(log_softmax) sum to 1, matches
    # the pure-JAX reference (loose atol to allow MXU f32 pass differences).
    row_sums = jnp.sum(jnp.exp(logp), axis=1)
    assert logp.shape == (N, NUM_CLASSES)
    assert bool(jnp.all(jnp.isfinite(logp)))
    assert bool(jnp.all(jnp.abs(row_sums - 1.0) < 1e-3))
    assert bool(jnp.max(jnp.abs(logp - ref)) < 2e-2)

    print("KERNEL_OK")
</pallas_src>

<mosaic_0001>
module attributes {stable_mosaic.version = 11 : i64} {
  func.func @gcn_fused_kernel(%arg0: memref<32x64xf32, #tpu.memory_space<vmem>>, %arg1: memref<32x32xf32, #tpu.memory_space<vmem>>, %arg2: memref<64x16xf32, #tpu.memory_space<vmem>>, %arg3: memref<1x16xf32, #tpu.memory_space<vmem>>, %arg4: memref<1x16xf32, #tpu.memory_space<vmem>>, %arg5: memref<1x16xf32, #tpu.memory_space<vmem>>, %arg6: memref<16x128xf32, #tpu.memory_space<vmem>>, %arg7: memref<1x128xf32, #tpu.memory_space<vmem>>, %arg8: memref<32x128xf32, #tpu.memory_space<vmem>>) attributes {dimension_semantics = [], scalar_prefetch = 0 : i64, scratch_operands = 0 : i64, tpu.core_type = #tpu.core_type<tc>} {
    %c0 = arith.constant 0 : index
    %c0_0 = arith.constant 0 : index
    %0 = vector.load %arg1[%c0, %c0_0] : memref<32x32xf32, #tpu.memory_space<vmem>>, vector<32x32xf32>
    %cst = arith.constant dense<0.000000e+00> : vector<32xf32>
    %1 = vector.multi_reduction <add>, %0, %cst [1] : vector<32x32xf32> to vector<32xf32>
    %2 = vector.shape_cast %1 : vector<32xf32> to vector<32x1xf32>
    %3 = math.rsqrt %2 : vector<32x1xf32>
    %cst_1 = arith.constant dense<0.000000e+00> : vector<32xf32>
    %4 = vector.multi_reduction <add>, %0, %cst_1 [0] : vector<32x32xf32> to vector<32xf32>
    %5 = vector.shape_cast %4 : vector<32xf32> to vector<1x32xf32>
    %6 = math.rsqrt %5 : vector<1x32xf32>
    %7 = vector.broadcast %3 : vector<32x1xf32> to vector<32x32xf32>
    %8 = arith.mulf %0, %7 : vector<32x32xf32>
    %9 = vector.broadcast %6 : vector<1x32xf32> to vector<32x32xf32>
    %10 = arith.mulf %8, %9 : vector<32x32xf32>
    %c0_2 = arith.constant 0 : index
    %c0_3 = arith.constant 0 : index
    %11 = vector.load %arg0[%c0_2, %c0_3] : memref<32x64xf32, #tpu.memory_space<vmem>>, vector<32x64xf32>
    %c0_4 = arith.constant 0 : index
    %c0_5 = arith.constant 0 : index
    %12 = vector.load %arg2[%c0_4, %c0_5] : memref<64x16xf32, #tpu.memory_space<vmem>>, vector<64x16xf32>
    %cst_6 = arith.constant dense<0.000000e+00> : vector<32x16xf32>
    %13 = tpu.matmul %11, %12, %cst_6 {dimension_numbers = #tpu.dot_dimension_numbers<[1], [0], [0], [1], [0, 0, 1, 1], [], []>} : vector<32x64xf32>, vector<64x16xf32>, vector<32x16xf32> -> vector<32x16xf32>
    %cst_7 = arith.constant dense<0.000000e+00> : vector<32x16xf32>
    %14 = tpu.matmul %10, %13, %cst_7 {dimension_numbers = #tpu.dot_dimension_numbers<[1], [0], [0], [1], [0, 0, 1, 1], [], []>} : vector<32x32xf32>, vector<32x16xf32>, vector<32x16xf32> -> vector<32x16xf32>
    %c0_8 = arith.constant 0 : index
    %c0_9 = arith.constant 0 : index
    %15 = vector.load %arg3[%c0_8, %c0_9] : memref<1x16xf32, #tpu.memory_space<vmem>>, vector<1x16xf32>
    %16 = vector.broadcast %15 : vector<1x16xf32> to vector<32x16xf32>
    %17 = arith.addf %14, %16 : vector<32x16xf32>
    %cst_10 = arith.constant 0.000000e+00 : f32
    %18 = vector.broadcast %cst_10 : f32 to vector<32x16xf32>
    %19 = arith.maximumf %17, %18 : vector<32x16xf32>
    %c0_11 = arith.constant 0 : index
    %c0_12 = arith.constant 0 : index
    %20 = vector.load %arg4[%c0_11, %c0_12] : memref<1x16xf32, #tpu.memory_space<vmem>>, vector<1x16xf32>
    %21 = vector.broadcast %20 : vector<1x16xf32> to vector<32x16xf32>
    %22 = arith.mulf %19, %21 : vector<32x16xf32>
    %c0_13 = arith.constant 0 : index
    %c0_14 = arith.constant 0 : index
    %23 = vector.load %arg5[%c0_13, %c0_14] : memref<1x16xf32, #tpu.memory_space<vmem>>, vector<1x16xf32>
    %24 = vector.broadcast %23 : vector<1x16xf32> to vector<32x16xf32>
    %25 = arith.addf %22, %24 : vector<32x16xf32>
    %c0_15 = arith.constant 0 : index
    %c0_16 = arith.constant 0 : index
    %26 = vector.load %arg6[%c0_15, %c0_16] : memref<16x128xf32, #tpu.memory_space<vmem>>, vector<16x128xf32>
    %cst_17 = arith.constant dense<0.000000e+00> : vector<32x128xf32>
    %27 = tpu.matmul %25, %26, %cst_17 {dimension_numbers = #tpu.dot_dimension_numbers<[1], [0], [0], [1], [0, 0, 1, 1], [], []>} : vector<32x16xf32>, vector<16x128xf32>, vector<32x128xf32> -> vector<32x128xf32>
    %cst_18 = arith.constant dense<0.000000e+00> : vector<32x128xf32>
    %28 = tpu.matmul %10, %27, %cst_18 {dimension_numbers = #tpu.dot_dimension_numbers<[1], [0], [0], [1], [0, 0, 1, 1], [], []>} : vector<32x32xf32>, vector<32x128xf32>, vector<32x128xf32> -> vector<32x128xf32>
    %c0_19 = arith.constant 0 : index
    %c0_20 = arith.constant 0 : index
    %29 = vector.load %arg7[%c0_19, %c0_20] : memref<1x128xf32, #tpu.memory_space<vmem>>, vector<1x128xf32>
    %30 = vector.broadcast %29 : vector<1x128xf32> to vector<32x128xf32>
    %31 = arith.addf %28, %30 : vector<32x128xf32>
    %cst_21 = arith.constant dense<0xFF800000> : vector<32xf32>
    %32 = vector.multi_reduction <maximumf>, %31, %cst_21 [1] : vector<32x128xf32> to vector<32xf32>
    %33 = vector.shape_cast %32 : vector<32xf32> to vector<32x1xf32>
    %34 = vector.broadcast %33 : vector<32x1xf32> to vector<32x128xf32>
    %35 = arith.subf %31, %34 : vector<32x128xf32>
    %36 = math.exp %35 : vector<32x128xf32>
    %cst_22 = arith.constant dense<0.000000e+00> : vector<32xf32>
    %37 = vector.multi_reduction <add>, %36, %cst_22 [1] : vector<32x128xf32> to vector<32xf32>
    %38 = vector.shape_cast %37 : vector<32xf32> to vector<32x1xf32>
    %39 = math.log %38 : vector<32x1xf32>
    %40 = vector.broadcast %39 : vector<32x1xf32> to vector<32x128xf32>
    %41 = arith.subf %35, %40 : vector<32x128xf32>
    %c0_23 = arith.constant 0 : index
    %c0_24 = arith.constant 0 : index
    %42 = vector.load %arg8[%c0_23, %c0_24] : memref<32x128xf32, #tpu.memory_space<vmem>>, vector<32x128xf32>
    tpu.vector_store %arg8[%c0_23, %c0_24], %41 {strides = array<i32>} : memref<32x128xf32, #tpu.memory_space<vmem>>, vector<32x128xf32>,
    return
  }
}

</mosaic_0001>

<llo_original>
// kernel: tpu_custom_call.1
$region0: #{tpu_custom_call.1}
  #allocation0 [shape = 'u32[]', space=smem, size = 0x4, offset = 0x4, fixed_abs, tag = 'smem constant byte address 0x4 - core index']
  #allocation1 [shape = 'u32[144,128]{1,0:T(1,128)}', space=vmem, size = 0x12000, scoped, tag = 'internal scratch']
  %s0 = inlined_call_operand.vmem [shape: f32[32,64], index: 0, kind: input, shape index: {}]
  %s1 = inlined_call_operand.vmem [shape: f32[32,32], index: 1, kind: input, shape index: {}]
  %s2 = inlined_call_operand.vmem [shape: f32[64,16], index: 2, kind: input, shape index: {}]
  %s3 = inlined_call_operand.vmem [shape: f32[1,16], index: 3, kind: input, shape index: {}]
  %s4 = inlined_call_operand.vmem [shape: f32[1,16], index: 4, kind: input, shape index: {}]
  %s5 = inlined_call_operand.vmem [shape: f32[1,16], index: 5, kind: input, shape index: {}]
  %s6 = inlined_call_operand.vmem [shape: f32[16,128], index: 6, kind: input, shape index: {}]
  %s7 = inlined_call_operand.vmem [shape: f32[1,128], index: 7, kind: input, shape index: {}]
  %s8 = inlined_call_operand.hbm [shape: f32[32,128], index: 8, kind: output, shape index: {}]
  %s9 = sld [smem:[#allocation0]]
  $region42: #{tpu_custom_call.1} parent=0
    _
  %s11 = ssub.s32 1, %s9
  %s12 = scalar_select 0, %s11, %s9
  $region1: #{tpu_custom_call.1} parent=0
    #allocation2 [shape = 'u8[16384]{0}', space=vmem, size = 0x4000, scoped, tag = 'output window, operand 0, single buffered']
    #allocation3 [shape = 's32[1]{0}', space=sflag, size = 0x4, scoped, tag = 'scoped memory for tpu_custom_call.1']
    %13 = vsyncpa [#allocation3], 0
    // Predicated region
    $region2: #{tpu_custom_call.1} parent=1 // pred_check
      _
    $region3: #{tpu_custom_call.1} parent=1 // pred_check_branch
      %15 = sbr.rel (0) target = $region5
    $region4: #{tpu_custom_call.1} parent=1 // pred_region
      _
    $region5: #{tpu_custom_call.1} parent=1 // pred_fallthru
      _
    // Predicated region
    $region6: #{tpu_custom_call.1} parent=1 // pred_check
      _
    $region7: #{tpu_custom_call.1} parent=1 // pred_check_branch
      %17 = sbr.rel (0) target = $region9
    $region8: #{tpu_custom_call.1} parent=1 // pred_region
      _
    $region9: #{tpu_custom_call.1} parent=1 // pred_fallthru
      _
    // Predicated region
    $region10: #{tpu_custom_call.1} parent=1 // pred_check
      _
    $region11: #{tpu_custom_call.1} parent=1 // pred_check_branch
      %19 = sbr.rel (0) target = $region13
    $region12: #{tpu_custom_call.1} parent=1 // pred_region
      _
    $region13: #{tpu_custom_call.1} parent=1 // pred_fallthru
      _
    // Predicated region
    $region14: #{tpu_custom_call.1} parent=1 // pred_check
      _
    $region15: #{tpu_custom_call.1} parent=1 // pred_check_branch
      %21 = sbr.rel (0) target = $region17
    $region16: #{tpu_custom_call.1} parent=1 // pred_region
      _
    $region17: #{tpu_custom_call.1} parent=1 // pred_fallthru
      _
    // Predicated region
    $region18: #{tpu_custom_call.1} parent=1 // pred_check
      _
    $region19: #{tpu_custom_call.1} parent=1 // pred_check_branch
      %23 = sbr.rel (0) target = $region21
    $region20: #{tpu_custom_call.1} parent=1 // pred_region
      _
    $region21: #{tpu_custom_call.1} parent=1 // pred_fallthru
      _
    // Predicated region
    $region22: #{tpu_custom_call.1} parent=1 // pred_check
      _
    $region23: #{tpu_custom_call.1} parent=1 // pred_check_branch
      %25 = sbr.rel (0) target = $region25
    $region24: #{tpu_custom_call.1} parent=1 // pred_region
      _
    $region25: #{tpu_custom_call.1} parent=1 // pred_fallthru
      _
    // Predicated region
    $region26: #{tpu_custom_call.1} parent=1 // pred_check
      _
    $region27: #{tpu_custom_call.1} parent=1 // pred_check_branch
      %27 = sbr.rel (0) target = $region29
    $region28: #{tpu_custom_call.1} parent=1 // pred_region
      _
    $region29: #{tpu_custom_call.1} parent=1 // pred_fallthru
      _
    // Predicated region
    $region30: #{tpu_custom_call.1} parent=1 // pred_check
      _
    $region31: #{tpu_custom_call.1} parent=1 // pred_check_branch
      %29 = sbr.rel (0) target = $region33
    $region32: #{tpu_custom_call.1} parent=1 // pred_region
      _
    $region33: #{tpu_custom_call.1} parent=1 // pred_fallthru
      _
    %v30 = vld [vmem:[%s1] sm:$0xff]
    %v31 = vld [vmem:[%s1 + $0x8] sm:$0xff]
    %v32 = vld [vmem:[%s1 + $0x10] sm:$0xff]
    %v33 = vld [vmem:[%s1 + $0x18] sm:$0xff]
    %vm34 = vcmask 261120
    %v35 = vsel %vm34, %v30, 0.0
    %36 = vadd.xlane.f32.xlu0 %v35
    %v37 = vpop.xlane.xlu0 %36
    %v38 = vsel %vm34, %v31, 0.0
    %39 = vadd.xlane.f32.xlu0 %v38
    %v40 = vpop.xlane.xlu0 %39
    %v41 = vsel %vm34, %v32, 0.0
    %42 = vadd.xlane.f32.xlu0 %v41
    %v43 = vpop.xlane.xlu0 %42
    %v44 = vsel %vm34, %v33, 0.0
    %45 = vadd.xlane.f32.xlu0 %v44
    %v46 = vpop.xlane.xlu0 %45
    %v47 = vrsqrt.pop %v37
    %v48 = vrsqrt.pop %v40
    %v49 = vrsqrt.pop %v43
    %v50 = vrsqrt.pop %v46
    %v51 = vadd.f32 %v35, %v38
    %v52 = vadd.f32 %v51, %v41
    %v53 = vadd.f32 %v52, %v44
    %v54 = vrot.slane %v53, 4
    %v55 = vadd.f32 %v53, %v54
    %v56 = vrot.slane %v55, 2
    %v57 = vadd.f32 %v55, %v56
    %v58 = vrot.slane %v57, 1
    %v59 = vadd.f32 %v57, %v58
    %v60 = vrsqrt.pop %v59
    %v61 = vmul.f32 %v30, %v47
    %v62 = vmul.f32 %v31, %v48
    %v63 = vmul.f32 %v32, %v49
    %v64 = vmul.f32 %v33, %v50
    %v65 = vmul.f32 %v61, %v60
    %v66 = vmul.f32 %v62, %v60
    %v67 = vmul.f32 %v63, %v60
    %v68 = vmul.f32 %v64, %v60
    %v69 = vld [vmem:[%s0] sm:$0xff]
    %v70 = vld [vmem:[%s0 + $0x8] sm:$0xff]
    %v71 = vld [vmem:[%s0 + $0x10] sm:$0xff]
    %v72 = vld [vmem:[%s0 + $0x18] sm:$0xff]
    %v73 = vld [vmem:[%s2] sm:$0xff]
    %v74 = vld [vmem:[%s2 + $0x8] sm:$0xff]
    %v75 = vld [vmem:[%s2 + $0x10] sm:$0xff]
    %v76 = vld [vmem:[%s2 + $0x18] sm:$0xff]
    %v77 = vld [vmem:[%s2 + $0x20] sm:$0xff]
    %v78 = vld [vmem:[%s2 + $0x28] sm:$0xff]
    %v79 = vld [vmem:[%s2 + $0x30] sm:$0xff]
    %v80 = vld [vmem:[%s2 + $0x38] sm:$0xff]
    %vm81 = vcmask 523264
    %v83 = vsel %vm81, %v69, 0
    %v86 = vsel %vm81, %v70, 0
    %v89 = vsel %vm81, %v71, 0
    %v92 = vsel %vm81, %v72, 0
    %94 = vmatprep.subr.mxu0 0.0
    %95 = vmatpush1.msra.mxu0 0.0
    %96 = vmatprep.subr.mxu0 0.0
    %97 = vmatpush1.msra.mxu0 0.0
    %98 = vmatprep.subr.mxu0 0.0
    %99 = vmatpush1.msra.mxu0 0.0
    %100 = vmatprep.subr.mxu0 0.0
    %101 = vmatpush1.msra.mxu0 0.0
    %102 = vmatprep.subr.mxu0 0.0
    %103 = vmatpush1.msra.mxu0 0.0
    %104 = vmatprep.subr.mxu0 0.0
    %105 = vmatpush1.msra.mxu0 0.0
    %106 = vmatprep.subr.mxu0 0.0
    %107 = vmatpush1.msra.mxu0 0.0
    %108 = vmatprep.subr.mxu0 0.0
    %109 = vmatpush1.msra.mxu0 0.0
    %110 = vmatprep.subr.mxu0 0.0
    %111 = vmatpush1.msra.mxu0 %v80
    %112 = vmatprep.subr.mxu0 0.0
    %113 = vmatpush1.msra.mxu0 %v79
    %114 = vmatprep.subr.mxu0 0.0
    %115 = vmatpush1.msra.mxu0 %v78
    %116 = vmatprep.subr.mxu0 0.0
    %117 = vmatpush1.msra.mxu0 %v77
    %118 = vmatprep.subr.mxu0 0.0
    %119 = vmatpush1.msra.mxu0 %v76
    %120 = vmatprep.subr.mxu0 0.0
    %121 = vmatpush1.msra.mxu0 %v75
    %122 = vmatprep.subr.mxu0 0.0
    %123 = vmatpush1.msra.mxu0 %v74
    %124 = vmatprep.subr.mxu0 0.0
    %125 = vmatpush1.msra.mxu0 %v73
    %126 = vmatprep.subr.mxu0 0.0
    %127 = vmatpush2.msra.mxu0 0.0
    %128 = vmatprep.subr.mxu0 0.0
    %129 = vmatpush2.msra.mxu0 0.0
    %130 = vmatprep.subr.mxu0 0.0
    %131 = vmatpush2.msra.mxu0 0.0
    %132 = vmatprep.subr.mxu0 0.0
    %133 = vmatpush2.msra.mxu0 0.0
    %134 = vmatprep.subr.mxu0 0.0
    %135 = vmatpush2.msra.mxu0 0.0
    %136 = vmatprep.subr.mxu0 0.0
    %137 = vmatpush2.msra.mxu0 0.0
    %138 = vmatprep.subr.mxu0 0.0
    %139 = vmatpush2.msra.mxu0 0.0
    %140 = vmatprep.subr.mxu0 0.0
    %141 = vmatpush2.msra.mxu0 0.0
    %142 = vmatprep.subr.mxu0 0.0
    %143 = vmatpush2.msra.mxu0 0.0
    %144 = vmatprep.subr.mxu0 0.0
    %145 = vmatpush2.msra.mxu0 0.0
    %146 = vmatprep.subr.mxu0 0.0
    %147 = vmatpush2.msra.mxu0 0.0
    %148 = vmatprep.subr.mxu0 0.0
    %149 = vmatpush2.msra.mxu0 0.0
    %150 = vmatprep.subr.mxu0 0.0
    %151 = vmatpush2.msra.mxu0 0.0
    %152 = vmatprep.subr.mxu0 0.0
    %153 = vmatpush2.msra.mxu0 0.0
    %154 = vmatprep.subr.mxu0 0.0
    %155 = vmatpush2.msra.mxu0 0.0
    %156 = vmatprep.subr.mxu0 0.0
    %157 = vmatpush2.msra.mxu0 0.0
    %158 = vmatprep.mubr.f32.mxu0 0.0
    %159 = vmatmul.mubr.f32.gmra.mxu0 %v83
    %v160 = vpop.f32.mrf.mxu0
    %v161 = vadd.f32 0.0, %v160
    %v162 = vpop.f32.mrf.mxu0
    %163 = vmatprep.mubr.f32.mxu0 0.0
    %164 = vmatmul.mubr.f32.gmra.mxu0 %v86
    %v165 = vpop.f32.mrf.mxu0
    %v166 = vadd.f32 0.0, %v165
    %v167 = vpop.f32.mrf.mxu0
    %168 = vmatprep.mubr.f32.mxu0 0.0
    %169 = vmatmul.mubr.f32.gmra.mxu0 %v89
    %v170 = vpop.f32.mrf.mxu0
    %v171 = vadd.f32 0.0, %v170
    %v172 = vpop.f32.mrf.mxu0
    %173 = vmatprep.mubr.f32.mxu0 0.0
    %174 = vmatmul.mubr.f32.gmra.mxu0 %v92
    %v175 = vpop.f32.mrf.mxu0
    %v176 = vadd.f32 0.0, %v175
    %v177 = vpop.f32.mrf.mxu0
    %178 = vdwg.mxu0
    %v179 = vld [vmem:[%s3] sm:$0x1]
    %v181 = vlaneseq
    %v182 = vshrl.u32 %v181, 7
    %v183 = vsub.s32 0, %v182
    %v184 = vrot.slane %v179, %v183
    %v187 = vsel %vm34, %v65, 0
    %v190 = vsel %vm34, %v66, 0
    %v193 = vsel %vm34, %v67, 0
    %v196 = vsel %vm34, %v68, 0
    %198 = vmatprep.subr.mxu0 0.0
    %199 = vmatpush1.msra.mxu0 0.0
    %200 = vmatprep.subr.mxu0 0.0
    %201 = vmatpush1.msra.mxu0 0.0
    %202 = vmatprep.subr.mxu0 0.0
    %203 = vmatpush1.msra.mxu0 0.0
    %204 = vmatprep.subr.mxu0 0.0
    %205 = vmatpush1.msra.mxu0 0.0
    %206 = vmatprep.subr.mxu0 0.0
    %207 = vmatpush1.msra.mxu0 0.0
    %208 = vmatprep.subr.mxu0 0.0
    %209 = vmatpush1.msra.mxu0 0.0
    %210 = vmatprep.subr.mxu0 0.0
    %211 = vmatpush1.msra.mxu0 0.0
    %212 = vmatprep.subr.mxu0 0.0
    %213 = vmatpush1.msra.mxu0 0.0
    %214 = vmatprep.subr.mxu0 0.0
    %215 = vmatpush1.msra.mxu0 0.0
    %216 = vmatprep.subr.mxu0 0.0
    %217 = vmatpush1.msra.mxu0 0.0
    %218 = vmatprep.subr.mxu0 0.0
    %219 = vmatpush1.msra.mxu0 0.0
    %220 = vmatprep.subr.mxu0 0.0
    %221 = vmatpush1.msra.mxu0 0.0
    %222 = vmatprep.subr.mxu0 0.0
    %223 = vmatpush1.msra.mxu0 %v176
    %224 = vmatprep.subr.mxu0 0.0
    %225 = vmatpush1.msra.mxu0 %v171
    %226 = vmatprep.subr.mxu0 0.0
    %227 = vmatpush1.msra.mxu0 %v166
    %228 = vmatprep.subr.mxu0 0.0
    %229 = vmatpush1.msra.mxu0 %v161
    %230 = vmatprep.subr.mxu0 0.0
    %231 = vmatpush2.msra.mxu0 0.0
    %232 = vmatprep.subr.mxu0 0.0
    %233 = vmatpush2.msra.mxu0 0.0
    %234 = vmatprep.subr.mxu0 0.0
    %235 = vmatpush2.msra.mxu0 0.0
    %236 = vmatprep.subr.mxu0 0.0
    %237 = vmatpush2.msra.mxu0 0.0
    %238 = vmatprep.subr.mxu0 0.0
    %239 = vmatpush2.msra.mxu0 0.0
    %240 = vmatprep.subr.mxu0 0.0
    %241 = vmatpush2.msra.mxu0 0.0
    %242 = vmatprep.subr.mxu0 0.0
    %243 = vmatpush2.msra.mxu0 0.0
    %244 = vmatprep.subr.mxu0 0.0
    %245 = vmatpush2.msra.mxu0 0.0
    %246 = vmatprep.subr.mxu0 0.0
    %247 = vmatpush2.msra.mxu0 0.0
    %248 = vmatprep.subr.mxu0 0.0
    %249 = vmatpush2.msra.mxu0 0.0
    %250 = vmatprep.subr.mxu0 0.0
    %251 = vmatpush2.msra.mxu0 0.0
    %252 = vmatprep.subr.mxu0 0.0
    %253 = vmatpush2.msra.mxu0 0.0
    %254 = vmatprep.subr.mxu0 0.0
    %255 = vmatpush2.msra.mxu0 0.0
    %256 = vmatprep.subr.mxu0 0.0
    %257 = vmatpush2.msra.mxu0 0.0
    %258 = vmatprep.subr.mxu0 0.0
    %259 = vmatpush2.msra.mxu0 0.0
    %260 = vmatprep.subr.mxu0 0.0
    %261 = vmatpush2.msra.mxu0 0.0
    %262 = vmatprep.mubr.f32.mxu0 0.0
    %263 = vmatmul.mubr.f32.gmra.mxu0 %v187
    %v264 = vpop.f32.mrf.mxu0
    %v265 = vadd.f32 %v184, %v264
    %v266 = vpop.f32.mrf.mxu0
    %267 = vmatprep.mubr.f32.mxu0 0.0
    %268 = vmatmul.mubr.f32.gmra.mxu0 %v190
    %v269 = vpop.f32.mrf.mxu0
    %v270 = vadd.f32 %v184, %v269
    %v271 = vpop.f32.mrf.mxu0
    %272 = vmatprep.mubr.f32.mxu0 0.0
    %273 = vmatmul.mubr.f32.gmra.mxu0 %v193
    %v274 = vpop.f32.mrf.mxu0
    %v275 = vadd.f32 %v184, %v274
    %v276 = vpop.f32.mrf.mxu0
    %277 = vmatprep.mubr.f32.mxu0 0.0
    %278 = vmatmul.mubr.f32.gmra.mxu0 %v196
    %v279 = vpop.f32.mrf.mxu0
    %v280 = vadd.f32 %v184, %v279
    %v281 = vpop.f32.mrf.mxu0
    %282 = vdwg.mxu0
    %v283 = vmax.f32 %v265, 0.0
    %v284 = vmax.f32 %v270, 0.0
    %v285 = vmax.f32 %v275, 0.0
    %v286 = vmax.f32 %v280, 0.0
    %v287 = vld [vmem:[%s4] sm:$0x1]
    %v289 = vlaneseq
    %v290 = vshrl.u32 %v289, 7
    %v291 = vsub.s32 0, %v290
    %v292 = vrot.slane %v287, %v291
    %v294 = vmul.f32 %v283, %v292
    %v295 = vmul.f32 %v284, %v292
    %v296 = vmul.f32 %v285, %v292
    %v297 = vmul.f32 %v286, %v292
    %v298 = vld [vmem:[%s5] sm:$0x1]
    %v300 = vlaneseq
    %v301 = vshrl.u32 %v300, 7
    %v302 = vsub.s32 0, %v301
    %v303 = vrot.slane %v298, %v302
    %v305 = vadd.f32 %v294, %v303
    %v306 = vadd.f32 %v295, %v303
    %v307 = vadd.f32 %v296, %v303
    %v308 = vadd.f32 %v297, %v303
    %v309 = vld [vmem:[%s6] sm:$0xff]
    %v310 = vld [vmem:[%s6 + $0x8] sm:$0xff]
    %vm311 = vcmask 130048
    %v313 = vsel %vm311, %v305, 0
    %v316 = vsel %vm311, %v306, 0
    %v319 = vsel %vm311, %v307, 0
    %v322 = vsel %vm311, %v308, 0
    %324 = vmatprep.subr.mxu0 0.0
    %325 = vmatpush1.msra.mxu0 0.0
    %326 = vmatprep.subr.mxu0 0.0
    %327 = vmatpush1.msra.mxu0 0.0
    %328 = vmatprep.subr.mxu0 0.0
    %329 = vmatpush1.msra.mxu0 0.0
    %330 = vmatprep.subr.mxu0 0.0
    %331 = vmatpush1.msra.mxu0 0.0
    %332 = vmatprep.subr.mxu0 0.0
    %333 = vmatpush1.msra.mxu0 0.0
    %334 = vmatprep.subr.mxu0 0.0
    %335 = vmatpush1.msra.mxu0 0.0
    %336 = vmatprep.subr.mxu0 0.0
    %337 = vmatpush1.msra.mxu0 0.0
    %338 = vmatprep.subr.mxu0 0.0
    %339 = vmatpush1.msra.mxu0 0.0
    %340 = vmatprep.subr.mxu0 0.0
    %341 = vmatpush1.msra.mxu0 0.0
    %342 = vmatprep.subr.mxu0 0.0
    %343 = vmatpush1.msra.mxu0 0.0
    %344 = vmatprep.subr.mxu0 0.0
    %345 = vmatpush1.msra.mxu0 0.0
    %346 = vmatprep.subr.mxu0 0.0
    %347 = vmatpush1.msra.mxu0 0.0
    %348 = vmatprep.subr.mxu0 0.0
    %349 = vmatpush1.msra.mxu0 0.0
    %350 = vmatprep.subr.mxu0 0.0
    %351 = vmatpush1.msra.mxu0 0.0
    %352 = vmatprep.subr.mxu0 0.0
    %353 = vmatpush1.msra.mxu0 %v310
    %354 = vmatprep.subr.mxu0 0.0
    %355 = vmatpush1.msra.mxu0 %v309
    %356 = vmatprep.subr.mxu0 0.0
    %357 = vmatpush2.msra.mxu0 0.0
    %358 = vmatprep.subr.mxu0 0.0
    %359 = vmatpush2.msra.mxu0 0.0
    %360 = vmatprep.subr.mxu0 0.0
    %361 = vmatpush2.msra.mxu0 0.0
    %362 = vmatprep.subr.mxu0 0.0
    %363 = vmatpush2.msra.mxu0 0.0
    %364 = vmatprep.subr.mxu0 0.0
    %365 = vmatpush2.msra.mxu0 0.0
    %366 = vmatprep.subr.mxu0 0.0
    %367 = vmatpush2.msra.mxu0 0.0
    %368 = vmatprep.subr.mxu0 0.0
    %369 = vmatpush2.msra.mxu0 0.0
    %370 = vmatprep.subr.mxu0 0.0
    %371 = vmatpush2.msra.mxu0 0.0
    %372 = vmatprep.subr.mxu0 0.0
    %373 = vmatpush2.msra.mxu0 0.0
    %374 = vmatprep.subr.mxu0 0.0
    %375 = vmatpush2.msra.mxu0 0.0
    %376 = vmatprep.subr.mxu0 0.0
    %377 = vmatpush2.msra.mxu0 0.0
    %378 = vmatprep.subr.mxu0 0.0
    %379 = vmatpush2.msra.mxu0 0.0
    %380 = vmatprep.subr.mxu0 0.0
    %381 = vmatpush2.msra.mxu0 0.0
    %382 = vmatprep.subr.mxu0 0.0
    %383 = vmatpush2.msra.mxu0 0.0
    %384 = vmatprep.subr.mxu0 0.0
    %385 = vmatpush2.msra.mxu0 0.0
    %386 = vmatprep.subr.mxu0 0.0
    %387 = vmatpush2.msra.mxu0 0.0
    %388 = vmatprep.mubr.f32.mxu0 0.0
    %389 = vmatmul.mubr.f32.gmra.mxu0 %v313
    %v390 = vpop.f32.mrf.mxu0
    %v391 = vadd.f32 0.0, %v390
    %v392 = vpop.f32.mrf.mxu0
    %393 = vmatprep.mubr.f32.mxu0 0.0
    %394 = vmatmul.mubr.f32.gmra.mxu0 %v316
    %v395 = vpop.f32.mrf.mxu0
    %v396 = vadd.f32 0.0, %v395
    %v397 = vpop.f32.mrf.mxu0
    %398 = vmatprep.mubr.f32.mxu0 0.0
    %399 = vmatmul.mubr.f32.gmra.mxu0 %v319
    %v400 = vpop.f32.mrf.mxu0
    %v401 = vadd.f32 0.0, %v400
    %v402 = vpop.f32.mrf.mxu0
    %403 = vmatprep.mubr.f32.mxu0 0.0
    %404 = vmatmul.mubr.f32.gmra.mxu0 %v322
    %v405 = vpop.f32.mrf.mxu0
    %v406 = vadd.f32 0.0, %v405
    %v407 = vpop.f32.mrf.mxu0
    %408 = vdwg.mxu0
    %v409 = vld [vmem:[%s7] sm:$0x1]
    %v411 = vlaneseq
    %v412 = vshrl.u32 %v411, 7
    %v413 = vsub.s32 0, %v412
    %v414 = vrot.slane %v409, %v413
    %416 = vmatprep.subr.mxu0 0.0
    %417 = vmatpush1.msra.mxu0 0.0
    %418 = vmatprep.subr.mxu0 0.0
    %419 = vmatpush1.msra.mxu0 0.0
    %420 = vmatprep.subr.mxu0 0.0
    %421 = vmatpush1.msra.mxu0 0.0
    %422 = vmatprep.subr.mxu0 0.0
    %423 = vmatpush1.msra.mxu0 0.0
    %424 = vmatprep.subr.mxu0 0.0
    %425 = vmatpush1.msra.mxu0 0.0
    %426 = vmatprep.subr.mxu0 0.0
    %427 = vmatpush1.msra.mxu0 0.0
    %428 = vmatprep.subr.mxu0 0.0
    %429 = vmatpush1.msra.mxu0 0.0
    %430 = vmatprep.subr.mxu0 0.0
    %431 = vmatpush1.msra.mxu0 0.0
    %432 = vmatprep.subr.mxu0 0.0
    %433 = vmatpush1.msra.mxu0 0.0
    %434 = vmatprep.subr.mxu0 0.0
    %435 = vmatpush1.msra.mxu0 0.0
    %436 = vmatprep.subr.mxu0 0.0
    %437 = vmatpush1.msra.mxu0 0.0
    %438 = vmatprep.subr.mxu0 0.0
    %439 = vmatpush1.msra.mxu0 0.0
    %440 = vmatprep.subr.mxu0 0.0
    %441 = vmatpush1.msra.mxu0 %v406
    %442 = vmatprep.subr.mxu0 0.0
    %443 = vmatpush1.msra.mxu0 %v401
    %444 = vmatprep.subr.mxu0 0.0
    %445 = vmatpush1.msra.mxu0 %v396
    %446 = vmatprep.subr.mxu0 0.0
    %447 = vmatpush1.msra.mxu0 %v391
    %448 = vmatprep.subr.mxu0 0.0
    %449 = vmatpush2.msra.mxu0 0.0
    %450 = vmatprep.subr.mxu0 0.0
    %451 = vmatpush2.msra.mxu0 0.0
    %452 = vmatprep.subr.mxu0 0.0
    %453 = vmatpush2.msra.mxu0 0.0
    %454 = vmatprep.subr.mxu0 0.0
    %455 = vmatpush2.msra.mxu0 0.0
    %456 = vmatprep.subr.mxu0 0.0
    %457 = vmatpush2.msra.mxu0 0.0
    %458 = vmatprep.subr.mxu0 0.0
    %459 = vmatpush2.msra.mxu0 0.0
    %460 = vmatprep.subr.mxu0 0.0
    %461 = vmatpush2.msra.mxu0 0.0
    %462 = vmatprep.subr.mxu0 0.0
    %463 = vmatpush2.msra.mxu0 0.0
    %464 = vmatprep.subr.mxu0 0.0
    %465 = vmatpush2.msra.mxu0 0.0
    %466 = vmatprep.subr.mxu0 0.0
    %467 = vmatpush2.msra.mxu0 0.0
    %468 = vmatprep.subr.mxu0 0.0
    %469 = vmatpush2.msra.mxu0 0.0
    %470 = vmatprep.subr.mxu0 0.0
    %471 = vmatpush2.msra.mxu0 0.0
    %472 = vmatprep.subr.mxu0 0.0
    %473 = vmatpush2.msra.mxu0 0.0
    %474 = vmatprep.subr.mxu0 0.0
    %475 = vmatpush2.msra.mxu0 0.0
    %476 = vmatprep.subr.mxu0 0.0
    %477 = vmatpush2.msra.mxu0 0.0
    %478 = vmatprep.subr.mxu0 0.0
    %479 = vmatpush2.msra.mxu0 0.0
    %480 = vmatprep.mubr.f32.mxu0 0.0
    %481 = vmatmul.mubr.f32.gmra.mxu0 %v187
    %v482 = vpop.f32.mrf.mxu0
    %v483 = vadd.f32 %v414, %v482
    %v484 = vpop.f32.mrf.mxu0
    %485 = vmatprep.mubr.f32.mxu0 0.0
    %486 = vmatmul.mubr.f32.gmra.mxu0 %v190
    %v487 = vpop.f32.mrf.mxu0
    %v488 = vadd.f32 %v414, %v487
    %v489 = vpop.f32.mrf.mxu0
    %490 = vmatprep.mubr.f32.mxu0 0.0
    %491 = vmatmul.mubr.f32.gmra.mxu0 %v193
    %v492 = vpop.f32.mrf.mxu0
    %v493 = vadd.f32 %v414, %v492
    %v494 = vpop.f32.mrf.mxu0
    %495 = vmatprep.mubr.f32.mxu0 0.0
    %496 = vmatmul.mubr.f32.gmra.mxu0 %v196
    %v497 = vpop.f32.mrf.mxu0
    %v498 = vadd.f32 %v414, %v497
    %v499 = vpop.f32.mrf.mxu0
    %500 = vdwg.mxu0
    %501 = vmax.xlane.f32.xlu0 %v483
    %v502 = vpop.xlane.xlu0 %501
    %503 = vmax.xlane.f32.xlu0 %v488
    %v504 = vpop.xlane.xlu0 %503
    %505 = vmax.xlane.f32.xlu0 %v493
    %v506 = vpop.xlane.xlu0 %505
    %507 = vmax.xlane.f32.xlu0 %v498
    %v508 = vpop.xlane.xlu0 %507
    %v509 = vsub.f32 %v483, %v502
    %v510 = vsub.f32 %v488, %v504
    %v511 = vsub.f32 %v493, %v506
    %v512 = vsub.f32 %v498, %v508
    %v513 = vmul.f32 %v509, 1.442695
    %v514 = vpow.pop %v513
    %v515 = vmul.f32 %v510, 1.442695
    %v516 = vpow.pop %v515
    %v517 = vmul.f32 %v511, 1.442695
    %v518 = vpow.pop %v517
    %v519 = vmul.f32 %v512, 1.442695
    %v520 = vpow.pop %v519
    %521 = vadd.xlane.f32.xlu0 %v514
    %v522 = vpop.xlane.xlu0 %521
    %523 = vadd.xlane.f32.xlu0 %v516
    %v524 = vpop.xlane.xlu0 %523
    %525 = vadd.xlane.f32.xlu0 %v518
    %v526 = vpop.xlane.xlu0 %525
    %527 = vadd.xlane.f32.xlu0 %v520
    %v528 = vpop.xlane.xlu0 %527
    %v529 = vlog2.pop %v522
    %v530 = vmul.f32 %v529, 0.6931472
    %v531 = vlog2.pop %v524
    %v532 = vmul.f32 %v531, 0.6931472
    %v533 = vlog2.pop %v526
    %v534 = vmul.f32 %v533, 0.6931472
    %v535 = vlog2.pop %v528
    %v536 = vmul.f32 %v535, 0.6931472
    %v537 = vsub.f32 %v509, %v530
    %v538 = vsub.f32 %v510, %v532
    %v539 = vsub.f32 %v511, %v534
    %v540 = vsub.f32 %v512, %v536
    %541 = vst [vmem:[#allocation2] sm:$0xff] %v537
    %542 = vst [vmem:[#allocation2 + $0x8] sm:$0xff] %v538
    %543 = vst [vmem:[#allocation2 + $0x10] sm:$0xff] %v539
    %544 = vst [vmem:[#allocation2 + $0x18] sm:$0xff] %v540
    // Predicated region
    $region34: #{tpu_custom_call.1} parent=1 // pred_check
      _
    $region35: #{tpu_custom_call.1} parent=1 // pred_check_branch
      %546 = sbr.rel (0) target = $region37
    $region36: #{tpu_custom_call.1} parent=1 // pred_region
      %s548 = ssub.s32 512, 512
      %549 = vsyncadd [#allocation3], %s548
      %s550 = sshll.u32 [#allocation2], 4
      %s551 = int_to_ptr.vmem [resolvable:$true] %s550
      %556 = dma.vmem_to_hbm [thread:$0]  %s551, 512, %s8, [#allocation3], 128, 128, 8
    $region37: #{tpu_custom_call.1} parent=1 // pred_fallthru
      _
    // Predicated region
    $region38: #{tpu_custom_call.1} parent=1 // pred_check
      _
    $region39: #{tpu_custom_call.1} parent=1 // pred_check_branch
      %558 = sbr.rel (0) target = $region41
    $region40: #{tpu_custom_call.1} parent=1 // pred_region
      %559 = dma.done [#allocation3], 512
    $region41: #{tpu_custom_call.1} parent=1 // pred_fallthru
      _
    %560 = vsyncpa [#allocation3], 1

</llo_original>
